<compile_context>
chip_gen: v7x
topology: tpu7x:2x2x1
jax: 0.10.0
libtpu: 0.0.40
codegen_flags: <defaults>
</compile_context>

<pallas_src>
import functools

import jax
import jax.numpy as jnp
from jax import lax
from jax.experimental import pallas as pl
from jax.experimental.pallas import tpu as pltpu


def _round_up(x, m):
    return (x + m - 1) // m * m


# ----------------------------------------------------------------------------
# Fused LinearBlock kernel.  Per batch tile, every layer runs on VMEM/vreg
# resident data:     h = relu(h @ W + b) * scale + shift
# (BatchNorm already folded into scale/shift; Dropout is identity in eval.)
# All layer widths are pre-padded to 128-lane multiples; only the valid
# out_dim columns are stored back to HBM.
# ----------------------------------------------------------------------------
def _linblock_kernel(*refs, n_layers, out_dim, compute_dtype):
    x_ref = refs[0]
    out_ref = refs[1 + 2 * n_layers]

    h = x_ref[...]                                       # (bm, d_in), f32
    for l in range(n_layers):
        w_ref = refs[1 + 2 * l]                          # (d_prev_pad, N_pad) bf16
        bss_ref = refs[2 + 2 * l]                        # (3, N_pad) f32
        bss = bss_ref[...]
        acc = jnp.dot(h.astype(compute_dtype), w_ref[...],
                      preferred_element_type=jnp.float32)   # MXU, f32 accumulate
        acc = acc + bss[0:1, :]                           # bias
        acc = jnp.maximum(acc, 0.0)                       # ReLU
        h = acc * bss[1:2, :] + bss[2:3, :]               # folded BN (eval)
        # Dropout(p): identity in eval mode.

    out_ref[...] = h[:, :out_dim].astype(out_ref.dtype)   # narrow (exact-width) store


# ----------------------------------------------------------------------------
# Wrapper: trace-time BN folding, 128-lane padding of every layer, batch-
# parallel grid, generation-aware VMEM limit.
# ----------------------------------------------------------------------------
def linear_block_forward(x, layers, *, eps=1e-5, compute_dtype=jnp.bfloat16,
                         max_batch_tile=512):
    B, d_in = x.shape
    n_layers = len(layers)
    out_dim = layers[-1]['w'].shape[1]

    # ---- parameter prep (trace time): fold BN, pad all layers to 128 lanes --
    flat_inputs = []
    prev_pad = d_in                       # input feature dim is not padded
    for p in layers:
        s = p['w'].shape[1]
        n_pad = _round_up(s, 128)

        w = p['w'].astype(compute_dtype)                  # (d_prev, s)
        # pad rows up to the (padded) previous width, cols up to n_pad
        w = jnp.pad(w, ((0, prev_pad - w.shape[0]), (0, n_pad - s)))

        scale = p['gamma'] * lax.rsqrt(p['var'] + eps)
        shift = p['beta'] - p['mean'] * scale
        bss = jnp.stack([p['b'], scale, shift]).astype(jnp.float32)  # (3, s)
        bss = jnp.pad(bss, ((0, 0), (0, n_pad - s)))                  # (3, n_pad)

        flat_inputs += [w, bss]
        prev_pad = n_pad

    # ---- batch tiling: sublane-aligned tile, "parallel" grid over batch -----
    # max_batch_tile=512 is a 256-multiple (full MXU pass on v6e/v7x); for
    # B > 512 this yields >= 2 grid steps so both v7x TensorCores are used.
    bm = min(_round_up(B, 8), max_batch_tile)
    b_pad = _round_up(B, bm)
    x_p = x if b_pad == B else jnp.pad(x, ((0, b_pad - B), (0, 0)))
    grid = (b_pad // bm,)

    in_specs = [pl.BlockSpec((bm, d_in), lambda i: (i, 0))]
    for a in flat_inputs:
        in_specs.append(pl.BlockSpec(a.shape, lambda i: (0, 0)))
    out_spec = pl.BlockSpec((bm, out_dim), lambda i: (i, 0))

    # ---- VMEM budget: double-buffered tiles + params, capped at 48 MiB ------
    param_bytes = sum(int(a.size) * a.dtype.itemsize for a in flat_inputs)
    tile_bytes = bm * d_in * x.dtype.itemsize + bm * out_dim * 4
    vmem_limit = int(min(48 * 1024 * 1024,
                         max(4 * 1024 * 1024, 4 * (param_bytes + tile_bytes))))

    kernel = functools.partial(_linblock_kernel, n_layers=n_layers,
                               out_dim=out_dim, compute_dtype=compute_dtype)
    out = pl.pallas_call(
        kernel,
        out_shape=jax.ShapeDtypeStruct((b_pad, out_dim), jnp.float32),
        grid=grid,
        in_specs=in_specs,
        out_specs=out_spec,
        compiler_params=pltpu.CompilerParams(
            dimension_semantics=("parallel",),
            vmem_limit_bytes=vmem_limit),
    )(x_p, *flat_inputs)
    return out if b_pad == B else out[:B]


# ----------------------------------------------------------------------------
# Pure-JAX reference (same mixed-precision recipe) for correctness checking.
# ----------------------------------------------------------------------------
def linear_block_reference(x, layers, *, eps=1e-5, compute_dtype=jnp.bfloat16):
    h = x.astype(jnp.float32)
    for p in layers:
        h = jnp.dot(h.astype(compute_dtype), p['w'].astype(compute_dtype),
                    preferred_element_type=jnp.float32) + p['b'].reshape(1, -1)
        h = jnp.maximum(h, 0.0)
        scale = p['gamma'] * lax.rsqrt(p['var'] + eps)
        shift = p['beta'] - p['mean'] * scale
        h = h * scale.reshape(1, -1) + shift.reshape(1, -1)
    return h


# ----------------------------------------------------------------------------
# Parameter construction (deterministic; mirrors nn.Linear default init and a
# BatchNorm1d in eval mode with arbitrary affine params / running statistics).
# ----------------------------------------------------------------------------
def init_linear_block_params(key, input_size, linear_conf):
    layers = []
    prev = input_size
    for i, (s, _drop_rate) in enumerate(linear_conf):
        k = jax.random.fold_in(key, i)
        kw, kb, kg, kbe, km, kv = jax.random.split(k, 6)
        bound = 1.0 / (prev ** 0.5)
        layers.append({
            'w': jax.random.uniform(kw, (prev, s), jnp.float32, -bound, bound),
            'b': jax.random.uniform(kb, (s,), jnp.float32, -bound, bound),
            'gamma': 1.0 + 0.1 * jax.random.normal(kg, (s,), jnp.float32),
            'beta': 0.1 * jax.random.normal(kbe, (s,), jnp.float32),
            'mean': 0.1 * jax.random.normal(km, (s,), jnp.float32),
            'var': 1.0 + 0.1 * jax.random.uniform(kv, (s,), jnp.float32),
        })
        prev = s
    return layers


# ----------------------------------------------------------------------------
if __name__ == "__main__":
    key = jax.random.PRNGKey(0)
    k_x, k_p = jax.random.split(key)

    # LinearBlock(input_size=32, linear_conf=[(64,0.1),(32,0.1),(16,0.1)])
    input_size = 32
    linear_conf = [(64, 0.1), (32, 0.1), (16, 0.1)]
    B = 8

    x = jax.random.normal(k_x, (B, input_size), dtype=jnp.float32)
    params = init_linear_block_params(k_p, input_size, linear_conf)

    out = jax.block_until_ready(linear_block_forward(x, params))
    ref = jax.block_until_ready(linear_block_reference(x, params))

    assert out.shape == (B, linear_conf[-1][0]), out.shape
    assert bool(jnp.all(jnp.isfinite(out)))
    assert bool(jnp.allclose(out, ref, atol=5e-3, rtol=5e-3)), \
        float(jnp.max(jnp.abs(out - ref)))
    print("KERNEL_OK")
</pallas_src>

<mosaic_0001>
module attributes {stable_mosaic.version = 11 : i64} {
  func.func @_linblock_kernel(%arg0: i32, %arg1: memref<8x32xf32, #tpu.memory_space<vmem>>, %arg2: memref<32x128xbf16, #tpu.memory_space<vmem>>, %arg3: memref<3x128xf32, #tpu.memory_space<vmem>>, %arg4: memref<128x128xbf16, #tpu.memory_space<vmem>>, %arg5: memref<3x128xf32, #tpu.memory_space<vmem>>, %arg6: memref<128x128xbf16, #tpu.memory_space<vmem>>, %arg7: memref<3x128xf32, #tpu.memory_space<vmem>>, %arg8: memref<8x16xf32, #tpu.memory_space<vmem>>) attributes {dimension_semantics = [#tpu.dimension_semantics<parallel>], iteration_bounds = array<i64: 1>, scalar_prefetch = 0 : i64, scratch_operands = 0 : i64, tpu.core_type = #tpu.core_type<tc>, window_params = [{transform_indices = @transform_0, window_bounds = array<i64: 8, 32>}, {pipeline_mode = #tpu.pipeline_mode<synchronous>, transform_indices = @transform_1, window_bounds = array<i64: 32, 128>}, {pipeline_mode = #tpu.pipeline_mode<synchronous>, transform_indices = @transform_2, window_bounds = array<i64: 3, 128>}, {pipeline_mode = #tpu.pipeline_mode<synchronous>, transform_indices = @transform_3, window_bounds = array<i64: 128, 128>}, {pipeline_mode = #tpu.pipeline_mode<synchronous>, transform_indices = @transform_4, window_bounds = array<i64: 3, 128>}, {pipeline_mode = #tpu.pipeline_mode<synchronous>, transform_indices = @transform_5, window_bounds = array<i64: 128, 128>}, {pipeline_mode = #tpu.pipeline_mode<synchronous>, transform_indices = @transform_6, window_bounds = array<i64: 3, 128>}, {transform_indices = @transform_7, window_bounds = array<i64: 8, 16>}]} {
    %c0 = arith.constant 0 : index
    %c0_0 = arith.constant 0 : index
    %0 = vector.load %arg1[%c0, %c0_0] : memref<8x32xf32, #tpu.memory_space<vmem>>, vector<8x32xf32>
    %c0_1 = arith.constant 0 : index
    %c0_2 = arith.constant 0 : index
    %1 = vector.load %arg3[%c0_1, %c0_2] : memref<3x128xf32, #tpu.memory_space<vmem>>, vector<3x128xf32>
    %2 = arith.truncf %0 : vector<8x32xf32> to vector<8x32xbf16>
    %c0_3 = arith.constant 0 : index
    %c0_4 = arith.constant 0 : index
    %3 = vector.load %arg2[%c0_3, %c0_4] : memref<32x128xbf16, #tpu.memory_space<vmem>>, vector<32x128xbf16>
    %cst = arith.constant dense<0.000000e+00> : vector<8x128xf32>
    %4 = tpu.matmul %2, %3, %cst {dimension_numbers = #tpu.dot_dimension_numbers<[1], [0], [0], [1], [0, 0, 1, 1], [], []>} : vector<8x32xbf16>, vector<32x128xbf16>, vector<8x128xf32> -> vector<8x128xf32>
    %5 = vector.extract_strided_slice %1 {offsets = [0, 0], sizes = [1, 128], strides = [1, 1]} : vector<3x128xf32> to vector<1x128xf32>
    %6 = vector.broadcast %5 : vector<1x128xf32> to vector<8x128xf32>
    %7 = arith.addf %4, %6 : vector<8x128xf32>
    %cst_5 = arith.constant 0.000000e+00 : f32
    %8 = vector.broadcast %cst_5 : f32 to vector<8x128xf32>
    %9 = arith.maximumf %7, %8 : vector<8x128xf32>
    %10 = vector.extract_strided_slice %1 {offsets = [1, 0], sizes = [1, 128], strides = [1, 1]} : vector<3x128xf32> to vector<1x128xf32>
    %11 = vector.broadcast %10 : vector<1x128xf32> to vector<8x128xf32>
    %12 = arith.mulf %9, %11 : vector<8x128xf32>
    %13 = vector.extract_strided_slice %1 {offsets = [2, 0], sizes = [1, 128], strides = [1, 1]} : vector<3x128xf32> to vector<1x128xf32>
    %14 = vector.broadcast %13 : vector<1x128xf32> to vector<8x128xf32>
    %15 = arith.addf %12, %14 : vector<8x128xf32>
    %c0_6 = arith.constant 0 : index
    %c0_7 = arith.constant 0 : index
    %16 = vector.load %arg5[%c0_6, %c0_7] : memref<3x128xf32, #tpu.memory_space<vmem>>, vector<3x128xf32>
    %17 = arith.truncf %15 : vector<8x128xf32> to vector<8x128xbf16>
    %c0_8 = arith.constant 0 : index
    %c0_9 = arith.constant 0 : index
    %18 = vector.load %arg4[%c0_8, %c0_9] : memref<128x128xbf16, #tpu.memory_space<vmem>>, vector<128x128xbf16>
    %cst_10 = arith.constant dense<0.000000e+00> : vector<8x128xf32>
    %19 = tpu.matmul %17, %18, %cst_10 {dimension_numbers = #tpu.dot_dimension_numbers<[1], [0], [0], [1], [0, 0, 1, 1], [], []>} : vector<8x128xbf16>, vector<128x128xbf16>, vector<8x128xf32> -> vector<8x128xf32>
    %20 = vector.extract_strided_slice %16 {offsets = [0, 0], sizes = [1, 128], strides = [1, 1]} : vector<3x128xf32> to vector<1x128xf32>
    %21 = vector.broadcast %20 : vector<1x128xf32> to vector<8x128xf32>
    %22 = arith.addf %19, %21 : vector<8x128xf32>
    %cst_11 = arith.constant 0.000000e+00 : f32
    %23 = vector.broadcast %cst_11 : f32 to vector<8x128xf32>
    %24 = arith.maximumf %22, %23 : vector<8x128xf32>
    %25 = vector.extract_strided_slice %16 {offsets = [1, 0], sizes = [1, 128], strides = [1, 1]} : vector<3x128xf32> to vector<1x128xf32>
    %26 = vector.broadcast %25 : vector<1x128xf32> to vector<8x128xf32>
    %27 = arith.mulf %24, %26 : vector<8x128xf32>
    %28 = vector.extract_strided_slice %16 {offsets = [2, 0], sizes = [1, 128], strides = [1, 1]} : vector<3x128xf32> to vector<1x128xf32>
    %29 = vector.broadcast %28 : vector<1x128xf32> to vector<8x128xf32>
    %30 = arith.addf %27, %29 : vector<8x128xf32>
    %c0_12 = arith.constant 0 : index
    %c0_13 = arith.constant 0 : index
    %31 = vector.load %arg7[%c0_12, %c0_13] : memref<3x128xf32, #tpu.memory_space<vmem>>, vector<3x128xf32>
    %32 = arith.truncf %30 : vector<8x128xf32> to vector<8x128xbf16>
    %c0_14 = arith.constant 0 : index
    %c0_15 = arith.constant 0 : index
    %33 = vector.load %arg6[%c0_14, %c0_15] : memref<128x128xbf16, #tpu.memory_space<vmem>>, vector<128x128xbf16>
    %cst_16 = arith.constant dense<0.000000e+00> : vector<8x128xf32>
    %34 = tpu.matmul %32, %33, %cst_16 {dimension_numbers = #tpu.dot_dimension_numbers<[1], [0], [0], [1], [0, 0, 1, 1], [], []>} : vector<8x128xbf16>, vector<128x128xbf16>, vector<8x128xf32> -> vector<8x128xf32>
    %35 = vector.extract_strided_slice %31 {offsets = [0, 0], sizes = [1, 128], strides = [1, 1]} : vector<3x128xf32> to vector<1x128xf32>
    %36 = vector.broadcast %35 : vector<1x128xf32> to vector<8x128xf32>
    %37 = arith.addf %34, %36 : vector<8x128xf32>
    %cst_17 = arith.constant 0.000000e+00 : f32
    %38 = vector.broadcast %cst_17 : f32 to vector<8x128xf32>
    %39 = arith.maximumf %37, %38 : vector<8x128xf32>
    %40 = vector.extract_strided_slice %31 {offsets = [1, 0], sizes = [1, 128], strides = [1, 1]} : vector<3x128xf32> to vector<1x128xf32>
    %41 = vector.broadcast %40 : vector<1x128xf32> to vector<8x128xf32>
    %42 = arith.mulf %39, %41 : vector<8x128xf32>
    %43 = vector.extract_strided_slice %31 {offsets = [2, 0], sizes = [1, 128], strides = [1, 1]} : vector<3x128xf32> to vector<1x128xf32>
    %44 = vector.broadcast %43 : vector<1x128xf32> to vector<8x128xf32>
    %45 = arith.addf %42, %44 : vector<8x128xf32>
    %46 = vector.extract_strided_slice %45 {offsets = [0, 0], sizes = [8, 16], strides = [1, 1]} : vector<8x128xf32> to vector<8x16xf32>
    %c0_18 = arith.constant 0 : index
    %c0_19 = arith.constant 0 : index
    %47 = vector.load %arg8[%c0_18, %c0_19] : memref<8x16xf32, #tpu.memory_space<vmem>>, vector<8x16xf32>
    tpu.vector_store %arg8[%c0_18, %c0_19], %46 {strides = array<i32>} : memref<8x16xf32, #tpu.memory_space<vmem>>, vector<8x16xf32>,
    return
  }
  func.func @transform_0(%arg0: i32) -> (i32, i32) {
    %c0_i32 = arith.constant 0 : i32
    %c0_i32_0 = arith.constant 0 : i32
    return %arg0, %c0_i32 : i32, i32
  }
  func.func @transform_1(%arg0: i32) -> (i32, i32) {
    %c0_i32 = arith.constant 0 : i32
    %c0_i32_0 = arith.constant 0 : i32
    %c0_i32_1 = arith.constant 0 : i32
    return %c0_i32, %c0_i32_0 : i32, i32
  }
  func.func @transform_2(%arg0: i32) -> (i32, i32) {
    %c0_i32 = arith.constant 0 : i32
    %c0_i32_0 = arith.constant 0 : i32
    %c0_i32_1 = arith.constant 0 : i32
    return %c0_i32, %c0_i32_0 : i32, i32
  }
  func.func @transform_3(%arg0: i32) -> (i32, i32) {
    %c0_i32 = arith.constant 0 : i32
    %c0_i32_0 = arith.constant 0 : i32
    %c0_i32_1 = arith.constant 0 : i32
    return %c0_i32, %c0_i32_0 : i32, i32
  }
  func.func @transform_4(%arg0: i32) -> (i32, i32) {
    %c0_i32 = arith.constant 0 : i32
    %c0_i32_0 = arith.constant 0 : i32
    %c0_i32_1 = arith.constant 0 : i32
    return %c0_i32, %c0_i32_0 : i32, i32
  }
  func.func @transform_5(%arg0: i32) -> (i32, i32) {
    %c0_i32 = arith.constant 0 : i32
    %c0_i32_0 = arith.constant 0 : i32
    %c0_i32_1 = arith.constant 0 : i32
    return %c0_i32, %c0_i32_0 : i32, i32
  }
  func.func @transform_6(%arg0: i32) -> (i32, i32) {
    %c0_i32 = arith.constant 0 : i32
    %c0_i32_0 = arith.constant 0 : i32
    %c0_i32_1 = arith.constant 0 : i32
    return %c0_i32, %c0_i32_0 : i32, i32
  }
  func.func @transform_7(%arg0: i32) -> (i32, i32) {
    %c0_i32 = arith.constant 0 : i32
    %c0_i32_0 = arith.constant 0 : i32
    return %arg0, %c0_i32 : i32, i32
  }
}

</mosaic_0001>

<llo_original>
// kernel: tpu_custom_call.1
$region0: #{tpu_custom_call.1}
  #allocation0 [shape = 'u32[]', space=smem, size = 0x4, offset = 0x4, fixed_abs, tag = 'smem constant byte address 0x4 - core index']
  #allocation1 [shape = 'u32[144,128]{1,0:T(1,128)}', space=vmem, size = 0x12000, scoped, tag = 'internal scratch']
  %s0 = inlined_call_operand.hbm [shape: f32[8,32], index: 0, kind: input, shape index: {}]
  %s1 = inlined_call_operand.hbm [shape: bf16[32,128], index: 1, kind: input, shape index: {}]
  %s2 = inlined_call_operand.vmem [shape: f32[3,128], index: 2, kind: input, shape index: {}]
  %s3 = inlined_call_operand.hbm [shape: bf16[128,128], index: 3, kind: input, shape index: {}]
  %s4 = inlined_call_operand.vmem [shape: f32[3,128], index: 4, kind: input, shape index: {}]
  %s5 = inlined_call_operand.hbm [shape: bf16[128,128], index: 5, kind: input, shape index: {}]
  %s6 = inlined_call_operand.vmem [shape: f32[3,128], index: 6, kind: input, shape index: {}]
  %s7 = inlined_call_operand.hbm [shape: f32[8,16], index: 7, kind: output, shape index: {}]
  %s8 = sld [smem:[#allocation0]]
  $region54: #{tpu_custom_call.1} parent=0
    _
  %s10 = ssub.s32 1, %s8
  %s11 = scalar_select 0, %s10, %s8
  $region1: #{tpu_custom_call.1} parent=0
    #allocation2 [shape = 'u8[4096]{0}', space=vmem, size = 0x1000, scoped, tag = 'input window, operand 0, single buffered']
    #allocation3 [shape = 's32[1]{0}', space=sflag, size = 0x4, scoped, tag = 'scoped memory for tpu_custom_call.1']
    #allocation4 [shape = 's32[1]{0}', space=sflag, size = 0x4, scoped, tag = 'scoped memory for tpu_custom_call.1']
    #allocation5 [shape = 'u8[8192]{0}', space=vmem, size = 0x2000, scoped, tag = 'input window, operand 1, single buffered']
    #allocation6 [shape = 's32[1]{0}', space=sflag, size = 0x4, scoped, tag = 'scoped memory for tpu_custom_call.1']
    #allocation7 [shape = 'u8[32768]{0}', space=vmem, size = 0x8000, scoped, tag = 'input window, operand 3, single buffered']
    #allocation8 [shape = 'u8[32768]{0}', space=vmem, size = 0x8000, scoped, tag = 'input window, operand 5, single buffered']
    #allocation9 [shape = 's32[1]{0}', space=sflag, size = 0x4, scoped, tag = 'scoped memory for tpu_custom_call.1']
    #allocation10 [shape = 'u8[4096]{0}', space=vmem, size = 0x1000, scoped, tag = 'output window, operand 0, single buffered']
    %12 = vsyncpa [#allocation3], 0
    %13 = vsyncpa [#allocation6], 0
    %14 = vsyncpa [#allocation9], 0
    %15 = vsyncpa [#allocation4], 0
    // Predicated region
    $region2: #{tpu_custom_call.1} parent=1 // pred_check
      _
    $region3: #{tpu_custom_call.1} parent=1 // pred_check_branch
      %17 = sbr.rel (0) target = $region5
    $region4: #{tpu_custom_call.1} parent=1 // pred_region
      %s19 = ssub.s32 128, 128
      %20 = vsyncadd [#allocation3], %s19
      %s22 = sshll.u32 [#allocation2], 4
      %s23 = int_to_ptr.vmem [resolvable:$true] %s22
      %25 = dma.hbm_to_vmem [thread:$0]  %s0, 128, %s23, [#allocation3]
    $region5: #{tpu_custom_call.1} parent=1 // pred_fallthru
      _
    // Predicated region
    $region6: #{tpu_custom_call.1} parent=1 // pred_check
      _
    $region7: #{tpu_custom_call.1} parent=1 // pred_check_branch
      %27 = sbr.rel (0) target = $region9
    $region8: #{tpu_custom_call.1} parent=1 // pred_region
      %s29 = ssub.s32 256, 256
      %30 = vsyncadd [#allocation6], %s29
      %s31 = sshll.u32 [#allocation5], 4
      %s32 = int_to_ptr.vmem [resolvable:$true] %s31
      %37 = dma.hbm_to_vmem [thread:$0]  %s1, 256, %s32, [#allocation6], 64, 64, 4
    $region9: #{tpu_custom_call.1} parent=1 // pred_fallthru
      _
    // Predicated region
    $region10: #{tpu_custom_call.1} parent=1 // pred_check
      _
    $region11: #{tpu_custom_call.1} parent=1 // pred_check_branch
      %39 = sbr.rel (0) target = $region13
    $region12: #{tpu_custom_call.1} parent=1 // pred_region
      _
    $region13: #{tpu_custom_call.1} parent=1 // pred_fallthru
      _
    // Predicated region
    $region14: #{tpu_custom_call.1} parent=1 // pred_check
      _
    $region15: #{tpu_custom_call.1} parent=1 // pred_check_branch
      %41 = sbr.rel (0) target = $region17
    $region16: #{tpu_custom_call.1} parent=1 // pred_region
      %s43 = ssub.s32 1024, 1024
      %44 = vsyncadd [#allocation6], %s43
      %s45 = sshll.u32 [#allocation7], 4
      %s46 = int_to_ptr.vmem [resolvable:$true] %s45
      %51 = dma.hbm_to_vmem [thread:$0]  %s3, 1024, %s46, [#allocation6], 64, 64, 4
    $region17: #{tpu_custom_call.1} parent=1 // pred_fallthru
      _
    // Predicated region
    $region18: #{tpu_custom_call.1} parent=1 // pred_check
      _
    $region19: #{tpu_custom_call.1} parent=1 // pred_check_branch
      %53 = sbr.rel (0) target = $region21
    $region20: #{tpu_custom_call.1} parent=1 // pred_region
      _
    $region21: #{tpu_custom_call.1} parent=1 // pred_fallthru
      _
    // Predicated region
    $region22: #{tpu_custom_call.1} parent=1 // pred_check
      _
    $region23: #{tpu_custom_call.1} parent=1 // pred_check_branch
      %55 = sbr.rel (0) target = $region25
    $region24: #{tpu_custom_call.1} parent=1 // pred_region
      %s57 = ssub.s32 1024, 1024
      %58 = vsyncadd [#allocation9], %s57
      %s59 = sshll.u32 [#allocation8], 4
      %s60 = int_to_ptr.vmem [resolvable:$true] %s59
      %65 = dma.hbm_to_vmem [thread:$0]  %s5, 1024, %s60, [#allocation9], 64, 64, 4
    $region25: #{tpu_custom_call.1} parent=1 // pred_fallthru
      _
    // Predicated region
    $region26: #{tpu_custom_call.1} parent=1 // pred_check
      _
    $region27: #{tpu_custom_call.1} parent=1 // pred_check_branch
      %67 = sbr.rel (0) target = $region29
    $region28: #{tpu_custom_call.1} parent=1 // pred_region
      _
    $region29: #{tpu_custom_call.1} parent=1 // pred_fallthru
      _
    // Predicated region
    $region30: #{tpu_custom_call.1} parent=1 // pred_check
      _
    $region31: #{tpu_custom_call.1} parent=1 // pred_check_branch
      %69 = sbr.rel (0) target = $region33
    $region32: #{tpu_custom_call.1} parent=1 // pred_region
      %70 = dma.done [#allocation3], 128
    $region33: #{tpu_custom_call.1} parent=1 // pred_fallthru
      _
    // Predicated region
    $region34: #{tpu_custom_call.1} parent=1 // pred_check
      _
    $region35: #{tpu_custom_call.1} parent=1 // pred_check_branch
      %72 = sbr.rel (0) target = $region37
    $region36: #{tpu_custom_call.1} parent=1 // pred_region
      %73 = dma.done [#allocation6], 256
    $region37: #{tpu_custom_call.1} parent=1 // pred_fallthru
      _
    // Predicated region
    $region38: #{tpu_custom_call.1} parent=1 // pred_check
      _
    $region39: #{tpu_custom_call.1} parent=1 // pred_check_branch
      %75 = sbr.rel (0) target = $region41
    $region40: #{tpu_custom_call.1} parent=1 // pred_region
      %76 = dma.done [#allocation6], 1024
    $region41: #{tpu_custom_call.1} parent=1 // pred_fallthru
      _
    // Predicated region
    $region42: #{tpu_custom_call.1} parent=1 // pred_check
      _
    $region43: #{tpu_custom_call.1} parent=1 // pred_check_branch
      %78 = sbr.rel (0) target = $region45
    $region44: #{tpu_custom_call.1} parent=1 // pred_region
      %79 = dma.done [#allocation9], 1024
    $region45: #{tpu_custom_call.1} parent=1 // pred_fallthru
      _
    %v81 = vld [vmem:[#allocation2] sm:$0xff]
    %v82 = vld [vmem:[%s2] sm:$0x7]
    %v83 = vpack.c.bf16 %v81, %v81
    %v84 = vld [vmem:[#allocation5] sm:$0xf]
    %v85 = vld [vmem:[#allocation5 + $0x4] sm:$0xf]
    %v86 = vld [vmem:[#allocation5 + $0x8] sm:$0xf]
    %v87 = vld [vmem:[#allocation5 + $0xc] sm:$0xf]
    %v88 = vlaneseq
    %v89 = vshrl.u32 %v88, 7
    %v90 = vsub.s32 0, %v89
    %v91 = vrot.slane %v82, %v90
    %v96 = vunpack.c.l.b16 %v84
    %v97 = vunpack.c.l.b16 %v85
    %v98 = vunpack.c.l.b16 %v86
    %v99 = vunpack.c.l.b16 %v87
    %v100 = vpack.c.b16 %v97, %v96
    %v101 = vpack.c.b16 %v99, %v98
    %vm104 = vcmask 261120
    %v106 = vsel %vm104, %v83, 0
    %108 = vmatprep.subr.bf16.mxu0 0
    %109 = vmatpush1.bf16.msra.mxu0 %v100
    %110 = vmatprep.subr.bf16.mxu0 0
    %111 = vmatpush1.bf16.msra.mxu0 %v101
    %112 = vmatprep.subr.bf16.mxu0 0
    %113 = vmatpush1.bf16.msra.mxu0 0
    %114 = vmatprep.subr.bf16.mxu0 0
    %115 = vmatpush1.bf16.msra.mxu0 0
    %116 = vmatprep.subr.bf16.mxu0 0
    %117 = vmatpush1.bf16.msra.mxu0 0
    %118 = vmatprep.subr.bf16.mxu0 0
    %119 = vmatpush1.bf16.msra.mxu0 0
    %120 = vmatprep.subr.bf16.mxu0 0
    %121 = vmatpush1.bf16.msra.mxu0 0
    %122 = vmatprep.subr.bf16.mxu0 0
    %123 = vmatpush1.bf16.msra.mxu0 0
    %124 = vmatprep.subr.bf16.mxu0 0
    %125 = vmatpush1.bf16.msra.mxu0 0
    %126 = vmatprep.subr.bf16.mxu0 0
    %127 = vmatpush1.bf16.msra.mxu0 0
    %128 = vmatprep.subr.bf16.mxu0 0
    %129 = vmatpush1.bf16.msra.mxu0 0
    %130 = vmatprep.subr.bf16.mxu0 0
    %131 = vmatpush1.bf16.msra.mxu0 0
    %132 = vmatprep.subr.bf16.mxu0 0
    %133 = vmatpush1.bf16.msra.mxu0 0
    %134 = vmatprep.subr.bf16.mxu0 0
    %135 = vmatpush1.bf16.msra.mxu0 0
    %136 = vmatprep.subr.bf16.mxu0 0
    %137 = vmatpush1.bf16.msra.mxu0 0
    %138 = vmatprep.subr.bf16.mxu0 0
    %139 = vmatpush1.bf16.msra.mxu0 0
    %140 = vmatprep.mubr.bf16.mxu0 0
    %141 = vmatmul.mubr.bf16.gmra.mrb[0].mxu0 %v106
    %v142 = vpop.f32.mrb[0].mxu0
    %v143 = vadd.f32 %v91, %v142
    %v144 = vpop.f32.mrb[0].mxu0
    %v145 = vpop.f32.mrb[0].mxu0
    %v146 = vpop.f32.mrb[0].mxu0
    %147 = vdwg.mxu0
    %v148 = vmax.f32 %v143, 0.0
    %v149 = vlaneseq
    %v150 = vshrl.u32 %v149, 7
    %v151 = vsub.s32 1, %v150
    %v152 = vrot.slane %v82, %v151
    %v153 = vmul.f32 %v148, %v152
    %v154 = vlaneseq
    %v155 = vshrl.u32 %v154, 7
    %v156 = vsub.s32 2, %v155
    %v157 = vrot.slane %v82, %v156
    %v158 = vadd.f32 %v153, %v157
    %v159 = vld [vmem:[%s4] sm:$0x7]
    %v160 = vpack.c.bf16 %v158, %v158
    %v161 = vld [vmem:[#allocation7] sm:$0xf]
    %v162 = vld [vmem:[#allocation7 + $0x4] sm:$0xf]
    %v163 = vld [vmem:[#allocation7 + $0x8] sm:$0xf]
    %v164 = vld [vmem:[#allocation7 + $0xc] sm:$0xf]
    %v165 = vld [vmem:[#allocation7 + $0x10] sm:$0xf]
    %v166 = vld [vmem:[#allocation7 + $0x14] sm:$0xf]
    %v167 = vld [vmem:[#allocation7 + $0x18] sm:$0xf]
    %v168 = vld [vmem:[#allocation7 + $0x1c] sm:$0xf]
    %v169 = vld [vmem:[#allocation7 + $0x20] sm:$0xf]
    %v170 = vld [vmem:[#allocation7 + $0x24] sm:$0xf]
    %v171 = vld [vmem:[#allocation7 + $0x28] sm:$0xf]
    %v172 = vld [vmem:[#allocation7 + $0x2c] sm:$0xf]
    %v173 = vld [vmem:[#allocation7 + $0x30] sm:$0xf]
    %v174 = vld [vmem:[#allocation7 + $0x34] sm:$0xf]
    %v175 = vld [vmem:[#allocation7 + $0x38] sm:$0xf]
    %v176 = vld [vmem:[#allocation7 + $0x3c] sm:$0xf]
    %v177 = vlaneseq
    %v178 = vshrl.u32 %v177, 7
    %v179 = vsub.s32 0, %v178
    %v180 = vrot.slane %v159, %v179
    %v197 = vunpack.c.l.b16 %v161
    %v198 = vunpack.c.l.b16 %v162
    %v199 = vunpack.c.l.b16 %v163
    %v200 = vunpack.c.l.b16 %v164
    %v201 = vunpack.c.l.b16 %v165
    %v202 = vunpack.c.l.b16 %v166
    %v203 = vunpack.c.l.b16 %v167
    %v204 = vunpack.c.l.b16 %v168
    %v205 = vunpack.c.l.b16 %v169
    %v206 = vunpack.c.l.b16 %v170
    %v207 = vunpack.c.l.b16 %v171
    %v208 = vunpack.c.l.b16 %v172
    %v209 = vunpack.c.l.b16 %v173
    %v210 = vunpack.c.l.b16 %v174
    %v211 = vunpack.c.l.b16 %v175
    %v212 = vunpack.c.l.b16 %v176
    %v213 = vpack.c.b16 %v198, %v197
    %v214 = vpack.c.b16 %v200, %v199
    %v215 = vpack.c.b16 %v202, %v201
    %v216 = vpack.c.b16 %v204, %v203
    %v217 = vpack.c.b16 %v206, %v205
    %v218 = vpack.c.b16 %v208, %v207
    %v219 = vpack.c.b16 %v210, %v209
    %v220 = vpack.c.b16 %v212, %v211
    %229 = vmatprep.subr.bf16.mxu0 0
    %230 = vmatpush1.bf16.msra.mxu0 %v213
    %231 = vmatprep.subr.bf16.mxu0 0
    %232 = vmatpush1.bf16.msra.mxu0 %v214
    %233 = vmatprep.subr.bf16.mxu0 0
    %234 = vmatpush1.bf16.msra.mxu0 %v215
    %235 = vmatprep.subr.bf16.mxu0 0
    %236 = vmatpush1.bf16.msra.mxu0 %v216
    %237 = vmatprep.subr.bf16.mxu0 0
    %238 = vmatpush1.bf16.msra.mxu0 %v217
    %239 = vmatprep.subr.bf16.mxu0 0
    %240 = vmatpush1.bf16.msra.mxu0 %v218
    %241 = vmatprep.subr.bf16.mxu0 0
    %242 = vmatpush1.bf16.msra.mxu0 %v219
    %243 = vmatprep.subr.bf16.mxu0 0
    %244 = vmatpush1.bf16.msra.mxu0 %v220
    %245 = vmatprep.subr.bf16.mxu0 0
    %246 = vmatpush1.bf16.msra.mxu0 0
    %247 = vmatprep.subr.bf16.mxu0 0
    %248 = vmatpush1.bf16.msra.mxu0 0
    %249 = vmatprep.subr.bf16.mxu0 0
    %250 = vmatpush1.bf16.msra.mxu0 0
    %251 = vmatprep.subr.bf16.mxu0 0
    %252 = vmatpush1.bf16.msra.mxu0 0
    %253 = vmatprep.subr.bf16.mxu0 0
    %254 = vmatpush1.bf16.msra.mxu0 0
    %255 = vmatprep.subr.bf16.mxu0 0
    %256 = vmatpush1.bf16.msra.mxu0 0
    %257 = vmatprep.subr.bf16.mxu0 0
    %258 = vmatpush1.bf16.msra.mxu0 0
    %259 = vmatprep.subr.bf16.mxu0 0
    %260 = vmatpush1.bf16.msra.mxu0 0
    %261 = vmatprep.mubr.bf16.mxu0 0
    %262 = vmatmul.mubr.bf16.gmra.mrb[0].mxu0 %v160
    %v263 = vpop.f32.mrb[0].mxu0
    %v264 = vadd.f32 %v180, %v263
    %v265 = vpop.f32.mrb[0].mxu0
    %v266 = vpop.f32.mrb[0].mxu0
    %v267 = vpop.f32.mrb[0].mxu0
    %268 = vdwg.mxu0
    %v269 = vmax.f32 %v264, 0.0
    %v270 = vlaneseq
    %v271 = vshrl.u32 %v270, 7
    %v272 = vsub.s32 1, %v271
    %v273 = vrot.slane %v159, %v272
    %v274 = vmul.f32 %v269, %v273
    %v275 = vlaneseq
    %v276 = vshrl.u32 %v275, 7
    %v277 = vsub.s32 2, %v276
    %v278 = vrot.slane %v159, %v277
    %v279 = vadd.f32 %v274, %v278
    %v280 = vld [vmem:[%s6] sm:$0x7]
    %v281 = vpack.c.bf16 %v279, %v279
    %v282 = vld [vmem:[#allocation8] sm:$0xf]
    %v283 = vld [vmem:[#allocation8 + $0x4] sm:$0xf]
    %v284 = vld [vmem:[#allocation8 + $0x8] sm:$0xf]
    %v285 = vld [vmem:[#allocation8 + $0xc] sm:$0xf]
    %v286 = vld [vmem:[#allocation8 + $0x10] sm:$0xf]
    %v287 = vld [vmem:[#allocation8 + $0x14] sm:$0xf]
    %v288 = vld [vmem:[#allocation8 + $0x18] sm:$0xf]
    %v289 = vld [vmem:[#allocation8 + $0x1c] sm:$0xf]
    %v290 = vld [vmem:[#allocation8 + $0x20] sm:$0xf]
    %v291 = vld [vmem:[#allocation8 + $0x24] sm:$0xf]
    %v292 = vld [vmem:[#allocation8 + $0x28] sm:$0xf]
    %v293 = vld [vmem:[#allocation8 + $0x2c] sm:$0xf]
    %v294 = vld [vmem:[#allocation8 + $0x30] sm:$0xf]
    %v295 = vld [vmem:[#allocation8 + $0x34] sm:$0xf]
    %v296 = vld [vmem:[#allocation8 + $0x38] sm:$0xf]
    %v297 = vld [vmem:[#allocation8 + $0x3c] sm:$0xf]
    %v298 = vlaneseq
    %v299 = vshrl.u32 %v298, 7
    %v300 = vsub.s32 0, %v299
    %v301 = vrot.slane %v280, %v300
    %v318 = vunpack.c.l.b16 %v282
    %v319 = vunpack.c.l.b16 %v283
    %v320 = vunpack.c.l.b16 %v284
    %v321 = vunpack.c.l.b16 %v285
    %v322 = vunpack.c.l.b16 %v286
    %v323 = vunpack.c.l.b16 %v287
    %v324 = vunpack.c.l.b16 %v288
    %v325 = vunpack.c.l.b16 %v289
    %v326 = vunpack.c.l.b16 %v290
    %v327 = vunpack.c.l.b16 %v291
    %v328 = vunpack.c.l.b16 %v292
    %v329 = vunpack.c.l.b16 %v293
    %v330 = vunpack.c.l.b16 %v294
    %v331 = vunpack.c.l.b16 %v295
    %v332 = vunpack.c.l.b16 %v296
    %v333 = vunpack.c.l.b16 %v297
    %v334 = vpack.c.b16 %v319, %v318
    %v335 = vpack.c.b16 %v321, %v320
    %v336 = vpack.c.b16 %v323, %v322
    %v337 = vpack.c.b16 %v325, %v324
    %v338 = vpack.c.b16 %v327, %v326
    %v339 = vpack.c.b16 %v329, %v328
    %v340 = vpack.c.b16 %v331, %v330
    %v341 = vpack.c.b16 %v333, %v332
    %350 = vmatprep.subr.bf16.mxu0 0
    %351 = vmatpush1.bf16.msra.mxu0 %v334
    %352 = vmatprep.subr.bf16.mxu0 0
    %353 = vmatpush1.bf16.msra.mxu0 %v335
    %354 = vmatprep.subr.bf16.mxu0 0
    %355 = vmatpush1.bf16.msra.mxu0 %v336
    %356 = vmatprep.subr.bf16.mxu0 0
    %357 = vmatpush1.bf16.msra.mxu0 %v337
    %358 = vmatprep.subr.bf16.mxu0 0
    %359 = vmatpush1.bf16.msra.mxu0 %v338
    %360 = vmatprep.subr.bf16.mxu0 0
    %361 = vmatpush1.bf16.msra.mxu0 %v339
    %362 = vmatprep.subr.bf16.mxu0 0
    %363 = vmatpush1.bf16.msra.mxu0 %v340
    %364 = vmatprep.subr.bf16.mxu0 0
    %365 = vmatpush1.bf16.msra.mxu0 %v341
    %366 = vmatprep.subr.bf16.mxu0 0
    %367 = vmatpush1.bf16.msra.mxu0 0
    %368 = vmatprep.subr.bf16.mxu0 0
    %369 = vmatpush1.bf16.msra.mxu0 0
    %370 = vmatprep.subr.bf16.mxu0 0
    %371 = vmatpush1.bf16.msra.mxu0 0
    %372 = vmatprep.subr.bf16.mxu0 0
    %373 = vmatpush1.bf16.msra.mxu0 0
    %374 = vmatprep.subr.bf16.mxu0 0
    %375 = vmatpush1.bf16.msra.mxu0 0
    %376 = vmatprep.subr.bf16.mxu0 0
    %377 = vmatpush1.bf16.msra.mxu0 0
    %378 = vmatprep.subr.bf16.mxu0 0
    %379 = vmatpush1.bf16.msra.mxu0 0
    %380 = vmatprep.subr.bf16.mxu0 0
    %381 = vmatpush1.bf16.msra.mxu0 0
    %382 = vmatprep.mubr.bf16.mxu0 0
    %383 = vmatmul.mubr.bf16.gmra.mrb[0].mxu0 %v281
    %v384 = vpop.f32.mrb[0].mxu0
    %v385 = vadd.f32 %v301, %v384
    %v386 = vpop.f32.mrb[0].mxu0
    %v387 = vpop.f32.mrb[0].mxu0
    %v388 = vpop.f32.mrb[0].mxu0
    %389 = vdwg.mxu0
    %v390 = vmax.f32 %v385, 0.0
    %v391 = vlaneseq
    %v392 = vshrl.u32 %v391, 7
    %v393 = vsub.s32 1, %v392
    %v394 = vrot.slane %v280, %v393
    %v395 = vmul.f32 %v390, %v394
    %v396 = vlaneseq
    %v397 = vshrl.u32 %v396, 7
    %v398 = vsub.s32 2, %v397
    %v399 = vrot.slane %v280, %v398
    %v400 = vadd.f32 %v395, %v399
    %vm401 = vcmask 130048
    %402 = vst.msk [vmem:[#allocation10] sm:$0xff] %vm401, %v400
    // Predicated region
    $region46: #{tpu_custom_call.1} parent=1 // pred_check
      _
    $region47: #{tpu_custom_call.1} parent=1 // pred_check_branch
      %404 = sbr.rel (0) target = $region49
    $region48: #{tpu_custom_call.1} parent=1 // pred_region
      %s406 = ssub.s32 128, 128
      %407 = vsyncadd [#allocation4], %s406
      %s409 = sshll.u32 [#allocation10], 4
      %s410 = int_to_ptr.vmem [resolvable:$true] %s409
      %412 = dma.vmem_to_hbm [thread:$0]  %s410, 128, %s7, [#allocation4]
    $region49: #{tpu_custom_call.1} parent=1 // pred_fallthru
      _
    // Predicated region
    $region50: #{tpu_custom_call.1} parent=1 // pred_check
      _
    $region51: #{tpu_custom_call.1} parent=1 // pred_check_branch
      %414 = sbr.rel (0) target = $region53
    $region52: #{tpu_custom_call.1} parent=1 // pred_region
      %415 = dma.done [#allocation4], 128
    $region53: #{tpu_custom_call.1} parent=1 // pred_fallthru
      _
    %416 = vsyncpa [#allocation3], 1
    %417 = vsyncpa [#allocation6], 1
    %418 = vsyncpa [#allocation9], 1
    %419 = vsyncpa [#allocation4], 1

</llo_original>
